<compile_context>
chip_gen: v7x
topology: tpu7x:2x2x1
jax: 0.10.0
libtpu: 0.0.40
codegen_flags: <defaults>
</compile_context>

<pallas_src>
import jax
import jax.numpy as jnp
from jax.experimental import pallas as pl
from jax.experimental.pallas import tpu as pltpu


def merge_layer_kernel(x1_ref, x2_ref, w1a_ref, w1b_ref, b1_ref, w2_ref, b2_ref, o_ref):
    """Fused concat -> fc1 -> ReLU -> fc2 for one row tile.

    x1_ref : (TILE_B, D1) f32     x2_ref : (TILE_B, D2) f32
    w1a_ref: (D1, D3)     f32     w1b_ref: (D2, D3)     f32   (fc1 weight split, [in, out])
    b1_ref : (1, D3)      f32
    w2_ref : (D3, D4)     f32     b2_ref : (1, D4)      f32
    o_ref  : (TILE_B, D4) f32
    """
    # fc1 on cat([x1, x2], 1) expressed as two MXU accumulations (no in-kernel concat/copy).
    h = jnp.dot(x1_ref[...], w1a_ref[...], preferred_element_type=jnp.float32)
    h = h + jnp.dot(x2_ref[...], w1b_ref[...], preferred_element_type=jnp.float32)
    # Bias + ReLU on the VPU in f32.
    h = jnp.maximum(h + b1_ref[...], 0.0)
    # fc2 stays f32 end-to-end (kernel is memory-bound; matches PyTorch numerics).
    y = jnp.dot(h, w2_ref[...], preferred_element_type=jnp.float32)
    o_ref[...] = y + b2_ref[...]


def merge_layer(x1, x2, w1, b1, w2, b2, *, tile_b=512):
    """y = ReLU(cat([x1, x2], 1) @ w1 + b1) @ w2 + b2, weights stored [in, out]."""
    B, d1 = x1.shape
    d2 = x2.shape[1]
    din, d3 = w1.shape
    assert din == d1 + d2, (din, d1, d2)
    d4 = w2.shape[1]

    # Row tile: multiple of 8 sublanes, no larger than the (rounded-up) batch.
    tile_b = max(8, (tile_b // 8) * 8)
    tile_b = min(tile_b, pl.cdiv(B, 8) * 8)
    grid = (pl.cdiv(B, tile_b),)  # ragged last block is handled by Pallas (masked stores)

    # Split fc1's weight once (tiny, one-time) so activations never need concatenating.
    w1a = w1[:d1].astype(jnp.float32)
    w1b = w1[d1:].astype(jnp.float32)
    b1r = b1.reshape(1, d3).astype(jnp.float32)
    w2f = w2.astype(jnp.float32)
    b2r = b2.reshape(1, d4).astype(jnp.float32)

    cost = pl.CostEstimate(
        flops=2 * B * (din * d3 + d3 * d4),
        transcendentals=0,
        bytes_accessed=4 * (B * din + B * d4 + w1.size + b1.size + w2.size + b2.size),
    )

    return pl.pallas_call(
        merge_layer_kernel,
        out_shape=jax.ShapeDtypeStruct((B, d4), jnp.float32),
        grid=grid,
        in_specs=[
            pl.BlockSpec((tile_b, d1), lambda i: (i, 0)),   # activations: pipelined per row tile
            pl.BlockSpec((tile_b, d2), lambda i: (i, 0)),
            pl.BlockSpec((d1, d3), lambda i: (0, 0)),       # weights/biases: VMEM-resident
            pl.BlockSpec((d2, d3), lambda i: (0, 0)),
            pl.BlockSpec((1, d3), lambda i: (0, 0)),
            pl.BlockSpec((d3, d4), lambda i: (0, 0)),
            pl.BlockSpec((1, d4), lambda i: (0, 0)),
        ],
        out_specs=pl.BlockSpec((tile_b, d4), lambda i: (i, 0)),  # compact (B, d4) writeback
        compiler_params=pltpu.CompilerParams(
            dimension_semantics=("parallel",),   # split batch tiles across v7x's two TCs
        ),
        cost_estimate=cost,
    )(x1.astype(jnp.float32), x2.astype(jnp.float32), w1a, w1b, b1r, w2f, b2r)


def xavier_normal(key, fan_in, fan_out):
    # torch.nn.init.xavier_normal_ : std = sqrt(2 / (fan_in + fan_out))
    std = (2.0 / (fan_in + fan_out)) ** 0.5
    return std * jax.random.normal(key, (fan_in, fan_out), dtype=jnp.float32)


def reference(x1, x2, w1, b1, w2, b2):
    hi = jax.lax.Precision.HIGHEST
    x = jnp.concatenate([x1, x2], axis=1)
    h = jnp.maximum(jnp.matmul(x, w1, precision=hi) + b1, 0.0)
    return jnp.matmul(h, w2, precision=hi) + b2


if __name__ == "__main__":
    # Module dims: MergeLayer(dim1, dim2, dim3, dim4).
    dim1, dim2, dim3, dim4 = 16, 16, 32, 8

    key = jax.random.PRNGKey(0)
    k_x1, k_x2, k_w1, k_b1, k_w2, k_b2 = jax.random.split(key, 6)

    # fc1: Linear(dim1+dim2 -> dim3), fc2: Linear(dim3 -> dim4); weights stored [in, out].
    w1 = xavier_normal(k_w1, dim1 + dim2, dim3)
    w2 = xavier_normal(k_w2, dim3, dim4)
    # PyTorch Linear bias default init: U(-1/sqrt(fan_in), 1/sqrt(fan_in))
    lim1 = 1.0 / (dim1 + dim2) ** 0.5
    lim2 = 1.0 / dim3 ** 0.5
    b1 = jax.random.uniform(k_b1, (dim3,), jnp.float32, -lim1, lim1)
    b2 = jax.random.uniform(k_b2, (dim4,), jnp.float32, -lim2, lim2)

    ok = True

    # Case 1: batch fits in a single row tile (grid = 1).
    B = 256
    x1 = jax.random.normal(k_x1, (B, dim1), dtype=jnp.float32)
    x2 = jax.random.normal(k_x2, (B, dim2), dtype=jnp.float32)
    out = jax.block_until_ready(merge_layer(x1, x2, w1, b1, w2, b2))
    ref = reference(x1, x2, w1, b1, w2, b2)
    ok &= out.shape == (B, dim4)
    ok &= bool(jnp.allclose(out, ref, atol=2e-3, rtol=2e-3))

    # Case 2: multi-step grid with a ragged last block (B not a multiple of tile_b).
    B2 = 200
    x1b = jax.random.normal(k_x2, (B2, dim1), dtype=jnp.float32)
    x2b = jax.random.normal(k_x1, (B2, dim2), dtype=jnp.float32)
    out2 = jax.block_until_ready(merge_layer(x1b, x2b, w1, b1, w2, b2, tile_b=64))
    ref2 = reference(x1b, x2b, w1, b1, w2, b2)
    ok &= out2.shape == (B2, dim4)
    ok &= bool(jnp.allclose(out2, ref2, atol=2e-3, rtol=2e-3))

    assert ok, (float(jnp.max(jnp.abs(out - ref))), float(jnp.max(jnp.abs(out2 - ref2))))
    print("KERNEL_OK")
</pallas_src>

<mosaic_0001>
module attributes {stable_mosaic.version = 11 : i64} {
  func.func @merge_layer_kernel(%arg0: i32, %arg1: memref<256x16xf32, #tpu.memory_space<vmem>>, %arg2: memref<256x16xf32, #tpu.memory_space<vmem>>, %arg3: memref<16x32xf32, #tpu.memory_space<vmem>>, %arg4: memref<16x32xf32, #tpu.memory_space<vmem>>, %arg5: memref<1x32xf32, #tpu.memory_space<vmem>>, %arg6: memref<32x8xf32, #tpu.memory_space<vmem>>, %arg7: memref<1x8xf32, #tpu.memory_space<vmem>>, %arg8: memref<256x8xf32, #tpu.memory_space<vmem>>) attributes {dimension_semantics = [#tpu.dimension_semantics<parallel>], iteration_bounds = array<i64: 1>, scalar_prefetch = 0 : i64, scratch_operands = 0 : i64, tpu.core_type = #tpu.core_type<tc>, window_params = [{transform_indices = @transform_0, window_bounds = array<i64: 256, 16>}, {transform_indices = @transform_1, window_bounds = array<i64: 256, 16>}, {pipeline_mode = #tpu.pipeline_mode<synchronous>, transform_indices = @transform_2, window_bounds = array<i64: 16, 32>}, {pipeline_mode = #tpu.pipeline_mode<synchronous>, transform_indices = @transform_3, window_bounds = array<i64: 16, 32>}, {pipeline_mode = #tpu.pipeline_mode<synchronous>, transform_indices = @transform_4, window_bounds = array<i64: 1, 32>}, {pipeline_mode = #tpu.pipeline_mode<synchronous>, transform_indices = @transform_5, window_bounds = array<i64: 32, 8>}, {pipeline_mode = #tpu.pipeline_mode<synchronous>, transform_indices = @transform_6, window_bounds = array<i64: 1, 8>}, {transform_indices = @transform_7, window_bounds = array<i64: 256, 8>}]} {
    %c0 = arith.constant 0 : index
    %c0_0 = arith.constant 0 : index
    %0 = vector.load %arg1[%c0, %c0_0] : memref<256x16xf32, #tpu.memory_space<vmem>>, vector<256x16xf32>
    %c0_1 = arith.constant 0 : index
    %c0_2 = arith.constant 0 : index
    %1 = vector.load %arg3[%c0_1, %c0_2] : memref<16x32xf32, #tpu.memory_space<vmem>>, vector<16x32xf32>
    %cst = arith.constant dense<0.000000e+00> : vector<256x32xf32>
    %2 = tpu.matmul %0, %1, %cst {dimension_numbers = #tpu.dot_dimension_numbers<[1], [0], [0], [1], [0, 0, 1, 1], [], []>} : vector<256x16xf32>, vector<16x32xf32>, vector<256x32xf32> -> vector<256x32xf32>
    %c0_3 = arith.constant 0 : index
    %c0_4 = arith.constant 0 : index
    %3 = vector.load %arg2[%c0_3, %c0_4] : memref<256x16xf32, #tpu.memory_space<vmem>>, vector<256x16xf32>
    %c0_5 = arith.constant 0 : index
    %c0_6 = arith.constant 0 : index
    %4 = vector.load %arg4[%c0_5, %c0_6] : memref<16x32xf32, #tpu.memory_space<vmem>>, vector<16x32xf32>
    %cst_7 = arith.constant dense<0.000000e+00> : vector<256x32xf32>
    %5 = tpu.matmul %3, %4, %cst_7 {dimension_numbers = #tpu.dot_dimension_numbers<[1], [0], [0], [1], [0, 0, 1, 1], [], []>} : vector<256x16xf32>, vector<16x32xf32>, vector<256x32xf32> -> vector<256x32xf32>
    %6 = arith.addf %2, %5 : vector<256x32xf32>
    %c0_8 = arith.constant 0 : index
    %c0_9 = arith.constant 0 : index
    %7 = vector.load %arg5[%c0_8, %c0_9] : memref<1x32xf32, #tpu.memory_space<vmem>>, vector<1x32xf32>
    %8 = vector.broadcast %7 : vector<1x32xf32> to vector<256x32xf32>
    %9 = arith.addf %6, %8 : vector<256x32xf32>
    %cst_10 = arith.constant 0.000000e+00 : f32
    %10 = vector.broadcast %cst_10 : f32 to vector<256x32xf32>
    %11 = arith.maximumf %9, %10 : vector<256x32xf32>
    %c0_11 = arith.constant 0 : index
    %c0_12 = arith.constant 0 : index
    %12 = vector.load %arg6[%c0_11, %c0_12] : memref<32x8xf32, #tpu.memory_space<vmem>>, vector<32x8xf32>
    %cst_13 = arith.constant dense<0.000000e+00> : vector<256x8xf32>
    %13 = tpu.matmul %11, %12, %cst_13 {dimension_numbers = #tpu.dot_dimension_numbers<[1], [0], [0], [1], [0, 0, 1, 1], [], []>} : vector<256x32xf32>, vector<32x8xf32>, vector<256x8xf32> -> vector<256x8xf32>
    %c0_14 = arith.constant 0 : index
    %c0_15 = arith.constant 0 : index
    %14 = vector.load %arg7[%c0_14, %c0_15] : memref<1x8xf32, #tpu.memory_space<vmem>>, vector<1x8xf32>
    %15 = vector.broadcast %14 : vector<1x8xf32> to vector<256x8xf32>
    %16 = arith.addf %13, %15 : vector<256x8xf32>
    %c0_16 = arith.constant 0 : index
    %c0_17 = arith.constant 0 : index
    %17 = vector.load %arg8[%c0_16, %c0_17] : memref<256x8xf32, #tpu.memory_space<vmem>>, vector<256x8xf32>
    tpu.vector_store %arg8[%c0_16, %c0_17], %16 {strides = array<i32>} : memref<256x8xf32, #tpu.memory_space<vmem>>, vector<256x8xf32>,
    return
  }
  func.func @transform_0(%arg0: i32) -> (i32, i32) {
    %c0_i32 = arith.constant 0 : i32
    %c0_i32_0 = arith.constant 0 : i32
    return %arg0, %c0_i32 : i32, i32
  }
  func.func @transform_1(%arg0: i32) -> (i32, i32) {
    %c0_i32 = arith.constant 0 : i32
    %c0_i32_0 = arith.constant 0 : i32
    return %arg0, %c0_i32 : i32, i32
  }
  func.func @transform_2(%arg0: i32) -> (i32, i32) {
    %c0_i32 = arith.constant 0 : i32
    %c0_i32_0 = arith.constant 0 : i32
    %c0_i32_1 = arith.constant 0 : i32
    return %c0_i32, %c0_i32_0 : i32, i32
  }
  func.func @transform_3(%arg0: i32) -> (i32, i32) {
    %c0_i32 = arith.constant 0 : i32
    %c0_i32_0 = arith.constant 0 : i32
    %c0_i32_1 = arith.constant 0 : i32
    return %c0_i32, %c0_i32_0 : i32, i32
  }
  func.func @transform_4(%arg0: i32) -> (i32, i32) {
    %c0_i32 = arith.constant 0 : i32
    %c0_i32_0 = arith.constant 0 : i32
    %c0_i32_1 = arith.constant 0 : i32
    return %c0_i32, %c0_i32_0 : i32, i32
  }
  func.func @transform_5(%arg0: i32) -> (i32, i32) {
    %c0_i32 = arith.constant 0 : i32
    %c0_i32_0 = arith.constant 0 : i32
    %c0_i32_1 = arith.constant 0 : i32
    return %c0_i32, %c0_i32_0 : i32, i32
  }
  func.func @transform_6(%arg0: i32) -> (i32, i32) {
    %c0_i32 = arith.constant 0 : i32
    %c0_i32_0 = arith.constant 0 : i32
    %c0_i32_1 = arith.constant 0 : i32
    return %c0_i32, %c0_i32_0 : i32, i32
  }
  func.func @transform_7(%arg0: i32) -> (i32, i32) {
    %c0_i32 = arith.constant 0 : i32
    %c0_i32_0 = arith.constant 0 : i32
    return %arg0, %c0_i32 : i32, i32
  }
}

</mosaic_0001>

<llo_original>
// kernel: tpu_custom_call.1
$region0: #{tpu_custom_call.1}
  #allocation0 [shape = 'u32[]', space=smem, size = 0x4, offset = 0x4, fixed_abs, tag = 'smem constant byte address 0x4 - core index']
  #allocation1 [shape = 'u32[144,128]{1,0:T(1,128)}', space=vmem, size = 0x12000, scoped, tag = 'internal scratch']
  %s0 = inlined_call_operand.vmem [shape: f32[256,16], index: 0, kind: input, shape index: {}]
  %s1 = inlined_call_operand.vmem [shape: f32[256,16], index: 1, kind: input, shape index: {}]
  %s2 = inlined_call_operand.vmem [shape: f32[16,32], index: 2, kind: input, shape index: {}]
  %s3 = inlined_call_operand.vmem [shape: f32[16,32], index: 3, kind: input, shape index: {}]
  %s4 = inlined_call_operand.vmem [shape: f32[1,32], index: 4, kind: input, shape index: {}]
  %s5 = inlined_call_operand.vmem [shape: f32[32,8], index: 5, kind: input, shape index: {}]
  %s6 = inlined_call_operand.vmem [shape: f32[1,8], index: 6, kind: input, shape index: {}]
  %s7 = inlined_call_operand.vmem [shape: f32[256,8], index: 7, kind: output, shape index: {}]
  %s8 = sld [smem:[#allocation0]]
  $region38: #{tpu_custom_call.1} parent=0
    _
  %s10 = ssub.s32 1, %s8
  %s11 = scalar_select 0, %s10, %s8
  // Predicated region
  $region2: #{tpu_custom_call.1} parent=0 // pred_check
    _
  $region3: #{tpu_custom_call.1} parent=0 // pred_check_branch
    %13 = sbr.rel (0) target = $region5
  $region4: #{tpu_custom_call.1} parent=0 // pred_region
    _
  $region5: #{tpu_custom_call.1} parent=0 // pred_fallthru
    _
  // Predicated region
  $region6: #{tpu_custom_call.1} parent=0 // pred_check
    _
  $region7: #{tpu_custom_call.1} parent=0 // pred_check_branch
    %15 = sbr.rel (0) target = $region9
  $region8: #{tpu_custom_call.1} parent=0 // pred_region
    _
  $region9: #{tpu_custom_call.1} parent=0 // pred_fallthru
    _
  // Predicated region
  $region10: #{tpu_custom_call.1} parent=0 // pred_check
    _
  $region11: #{tpu_custom_call.1} parent=0 // pred_check_branch
    %17 = sbr.rel (0) target = $region13
  $region12: #{tpu_custom_call.1} parent=0 // pred_region
    _
  $region13: #{tpu_custom_call.1} parent=0 // pred_fallthru
    _
  // Predicated region
  $region14: #{tpu_custom_call.1} parent=0 // pred_check
    _
  $region15: #{tpu_custom_call.1} parent=0 // pred_check_branch
    %19 = sbr.rel (0) target = $region17
  $region16: #{tpu_custom_call.1} parent=0 // pred_region
    _
  $region17: #{tpu_custom_call.1} parent=0 // pred_fallthru
    _
  // Predicated region
  $region18: #{tpu_custom_call.1} parent=0 // pred_check
    _
  $region19: #{tpu_custom_call.1} parent=0 // pred_check_branch
    %21 = sbr.rel (0) target = $region21
  $region20: #{tpu_custom_call.1} parent=0 // pred_region
    _
  $region21: #{tpu_custom_call.1} parent=0 // pred_fallthru
    _
  // Predicated region
  $region22: #{tpu_custom_call.1} parent=0 // pred_check
    _
  $region23: #{tpu_custom_call.1} parent=0 // pred_check_branch
    %23 = sbr.rel (0) target = $region25
  $region24: #{tpu_custom_call.1} parent=0 // pred_region
    _
  $region25: #{tpu_custom_call.1} parent=0 // pred_fallthru
    _
  // Predicated region
  $region26: #{tpu_custom_call.1} parent=0 // pred_check
    _
  $region27: #{tpu_custom_call.1} parent=0 // pred_check_branch
    %25 = sbr.rel (0) target = $region29
  $region28: #{tpu_custom_call.1} parent=0 // pred_region
    _
  $region29: #{tpu_custom_call.1} parent=0 // pred_fallthru
    _
  %v26 = vld [vmem:[%s0] sm:$0xff]
  %v27 = vld [vmem:[%s0 + $0x8] sm:$0xff]
  %v28 = vld [vmem:[%s0 + $0x10] sm:$0xff]
  %v29 = vld [vmem:[%s0 + $0x18] sm:$0xff]
  %v30 = vld [vmem:[%s0 + $0x20] sm:$0xff]
  %v31 = vld [vmem:[%s0 + $0x28] sm:$0xff]
  %v32 = vld [vmem:[%s0 + $0x30] sm:$0xff]
  %v33 = vld [vmem:[%s0 + $0x38] sm:$0xff]
  %v34 = vld [vmem:[%s0 + $0x40] sm:$0xff]
  %v35 = vld [vmem:[%s0 + $0x48] sm:$0xff]
  %v36 = vld [vmem:[%s0 + $0x50] sm:$0xff]
  %v37 = vld [vmem:[%s0 + $0x58] sm:$0xff]
  %v38 = vld [vmem:[%s0 + $0x60] sm:$0xff]
  %v39 = vld [vmem:[%s0 + $0x68] sm:$0xff]
  %v40 = vld [vmem:[%s0 + $0x70] sm:$0xff]
  %v41 = vld [vmem:[%s0 + $0x78] sm:$0xff]
  %v42 = vld [vmem:[%s0 + $0x80] sm:$0xff]
  %v43 = vld [vmem:[%s0 + $0x88] sm:$0xff]
  %v44 = vld [vmem:[%s0 + $0x90] sm:$0xff]
  %v45 = vld [vmem:[%s0 + $0x98] sm:$0xff]
  %v46 = vld [vmem:[%s0 + $0xa0] sm:$0xff]
  %v47 = vld [vmem:[%s0 + $0xa8] sm:$0xff]
  %v48 = vld [vmem:[%s0 + $0xb0] sm:$0xff]
  %v49 = vld [vmem:[%s0 + $0xb8] sm:$0xff]
  %v50 = vld [vmem:[%s0 + $0xc0] sm:$0xff]
  %v51 = vld [vmem:[%s0 + $0xc8] sm:$0xff]
  %v52 = vld [vmem:[%s0 + $0xd0] sm:$0xff]
  %v53 = vld [vmem:[%s0 + $0xd8] sm:$0xff]
  %v54 = vld [vmem:[%s0 + $0xe0] sm:$0xff]
  %v55 = vld [vmem:[%s0 + $0xe8] sm:$0xff]
  %v56 = vld [vmem:[%s0 + $0xf0] sm:$0xff]
  %v57 = vld [vmem:[%s0 + $0xf8] sm:$0xff]
  %v58 = vld [vmem:[%s2] sm:$0xff]
  %v59 = vld [vmem:[%s2 + $0x8] sm:$0xff]
  %v60 = vld [vmem:[%s1] sm:$0xff]
  %v61 = vld [vmem:[%s1 + $0x8] sm:$0xff]
  %v62 = vld [vmem:[%s1 + $0x10] sm:$0xff]
  %v63 = vld [vmem:[%s1 + $0x18] sm:$0xff]
  %v64 = vld [vmem:[%s1 + $0x20] sm:$0xff]
  %v65 = vld [vmem:[%s1 + $0x28] sm:$0xff]
  %v66 = vld [vmem:[%s1 + $0x30] sm:$0xff]
  %v67 = vld [vmem:[%s1 + $0x38] sm:$0xff]
  %v68 = vld [vmem:[%s1 + $0x40] sm:$0xff]
  %v69 = vld [vmem:[%s1 + $0x48] sm:$0xff]
  %v70 = vld [vmem:[%s1 + $0x50] sm:$0xff]
  %v71 = vld [vmem:[%s1 + $0x58] sm:$0xff]
  %v72 = vld [vmem:[%s1 + $0x60] sm:$0xff]
  %v73 = vld [vmem:[%s1 + $0x68] sm:$0xff]
  %v74 = vld [vmem:[%s1 + $0x70] sm:$0xff]
  %v75 = vld [vmem:[%s1 + $0x78] sm:$0xff]
  %v76 = vld [vmem:[%s1 + $0x80] sm:$0xff]
  %v77 = vld [vmem:[%s1 + $0x88] sm:$0xff]
  %v78 = vld [vmem:[%s1 + $0x90] sm:$0xff]
  %v79 = vld [vmem:[%s1 + $0x98] sm:$0xff]
  %v80 = vld [vmem:[%s1 + $0xa0] sm:$0xff]
  %v81 = vld [vmem:[%s1 + $0xa8] sm:$0xff]
  %v82 = vld [vmem:[%s1 + $0xb0] sm:$0xff]
  %v83 = vld [vmem:[%s1 + $0xb8] sm:$0xff]
  %v84 = vld [vmem:[%s1 + $0xc0] sm:$0xff]
  %v85 = vld [vmem:[%s1 + $0xc8] sm:$0xff]
  %v86 = vld [vmem:[%s1 + $0xd0] sm:$0xff]
  %v87 = vld [vmem:[%s1 + $0xd8] sm:$0xff]
  %v88 = vld [vmem:[%s1 + $0xe0] sm:$0xff]
  %v89 = vld [vmem:[%s1 + $0xe8] sm:$0xff]
  %v90 = vld [vmem:[%s1 + $0xf0] sm:$0xff]
  %v91 = vld [vmem:[%s1 + $0xf8] sm:$0xff]
  %v92 = vld [vmem:[%s3] sm:$0xff]
  %v93 = vld [vmem:[%s3 + $0x8] sm:$0xff]
  %vm94 = vcmask 130048
  %v96 = vsel %vm94, %v60, 0
  %v99 = vsel %vm94, %v61, 0
  %v102 = vsel %vm94, %v62, 0
  %v105 = vsel %vm94, %v63, 0
  %v108 = vsel %vm94, %v64, 0
  %v111 = vsel %vm94, %v65, 0
  %v114 = vsel %vm94, %v66, 0
  %v117 = vsel %vm94, %v67, 0
  %v120 = vsel %vm94, %v68, 0
  %v123 = vsel %vm94, %v69, 0
  %v126 = vsel %vm94, %v70, 0
  %v129 = vsel %vm94, %v71, 0
  %v132 = vsel %vm94, %v72, 0
  %v135 = vsel %vm94, %v73, 0
  %v138 = vsel %vm94, %v74, 0
  %v141 = vsel %vm94, %v75, 0
  %v144 = vsel %vm94, %v76, 0
  %v147 = vsel %vm94, %v77, 0
  %v150 = vsel %vm94, %v78, 0
  %v153 = vsel %vm94, %v79, 0
  %v156 = vsel %vm94, %v80, 0
  %v159 = vsel %vm94, %v81, 0
  %v162 = vsel %vm94, %v82, 0
  %v165 = vsel %vm94, %v83, 0
  %v168 = vsel %vm94, %v84, 0
  %v171 = vsel %vm94, %v85, 0
  %v174 = vsel %vm94, %v86, 0
  %v177 = vsel %vm94, %v87, 0
  %v180 = vsel %vm94, %v88, 0
  %v183 = vsel %vm94, %v89, 0
  %v186 = vsel %vm94, %v90, 0
  %v189 = vsel %vm94, %v91, 0
  %191 = vmatprep.subr.mxu0 0.0
  %192 = vmatpush1.msra.mxu0 %v92
  %193 = vmatprep.subr.mxu0 0.0
  %194 = vmatpush1.msra.mxu0 %v93
  %195 = vmatprep.subr.mxu0 0.0
  %196 = vmatpush1.msra.mxu0 0.0
  %197 = vmatprep.subr.mxu0 0.0
  %198 = vmatpush1.msra.mxu0 0.0
  %199 = vmatprep.subr.mxu0 0.0
  %200 = vmatpush1.msra.mxu0 0.0
  %201 = vmatprep.subr.mxu0 0.0
  %202 = vmatpush1.msra.mxu0 0.0
  %203 = vmatprep.subr.mxu0 0.0
  %204 = vmatpush1.msra.mxu0 0.0
  %205 = vmatprep.subr.mxu0 0.0
  %206 = vmatpush1.msra.mxu0 0.0
  %207 = vmatprep.subr.mxu0 0.0
  %208 = vmatpush1.msra.mxu0 0.0
  %209 = vmatprep.subr.mxu0 0.0
  %210 = vmatpush1.msra.mxu0 0.0
  %211 = vmatprep.subr.mxu0 0.0
  %212 = vmatpush1.msra.mxu0 0.0
  %213 = vmatprep.subr.mxu0 0.0
  %214 = vmatpush1.msra.mxu0 0.0
  %215 = vmatprep.subr.mxu0 0.0
  %216 = vmatpush1.msra.mxu0 0.0
  %217 = vmatprep.subr.mxu0 0.0
  %218 = vmatpush1.msra.mxu0 0.0
  %219 = vmatprep.subr.mxu0 0.0
  %220 = vmatpush1.msra.mxu0 0.0
  %221 = vmatprep.subr.mxu0 0.0
  %222 = vmatpush1.msra.mxu0 0.0
  %223 = vmatprep.subr.mxu0 0.0
  %224 = vmatpush1.msra.mxu0 0.0
  %225 = vmatprep.subr.mxu0 0.0
  %226 = vmatpush1.msra.mxu0 0.0
  %227 = vmatprep.subr.mxu0 0.0
  %228 = vmatpush1.msra.mxu0 0.0
  %229 = vmatprep.subr.mxu0 0.0
  %230 = vmatpush1.msra.mxu0 0.0
  %231 = vmatprep.subr.mxu0 0.0
  %232 = vmatpush1.msra.mxu0 0.0
  %233 = vmatprep.subr.mxu0 0.0
  %234 = vmatpush1.msra.mxu0 0.0
  %235 = vmatprep.subr.mxu0 0.0
  %236 = vmatpush1.msra.mxu0 0.0
  %237 = vmatprep.subr.mxu0 0.0
  %238 = vmatpush1.msra.mxu0 0.0
  %239 = vmatprep.subr.mxu0 0.0
  %240 = vmatpush1.msra.mxu0 0.0
  %241 = vmatprep.subr.mxu0 0.0
  %242 = vmatpush1.msra.mxu0 0.0
  %243 = vmatprep.subr.mxu0 0.0
  %244 = vmatpush1.msra.mxu0 0.0
  %245 = vmatprep.subr.mxu0 0.0
  %246 = vmatpush1.msra.mxu0 0.0
  %247 = vmatprep.subr.mxu0 0.0
  %248 = vmatpush1.msra.mxu0 0.0
  %249 = vmatprep.subr.mxu0 0.0
  %250 = vmatpush1.msra.mxu0 0.0
  %251 = vmatprep.subr.mxu0 0.0
  %252 = vmatpush1.msra.mxu0 0.0
  %253 = vmatprep.subr.mxu0 0.0
  %254 = vmatpush1.msra.mxu0 0.0
  %255 = vmatprep.mubr.f32.mxu0 0.0
  %256 = vmatmul.mubr.f32.gmra.mrb[0].mxu0 %v96
  %v257 = vpop.f32.mrb[0].mxu0
  %v258 = vadd.f32 0.0, %v257
  %v259 = vpop.f32.mrb[0].mxu0
  %260 = vmatprep.mubr.f32.mxu0 0.0
  %261 = vmatmul.mubr.f32.gmra.mrb[0].mxu0 %v99
  %v262 = vpop.f32.mrb[0].mxu0
  %v263 = vadd.f32 0.0, %v262
  %v264 = vpop.f32.mrb[0].mxu0
  %265 = vmatprep.mubr.f32.mxu0 0.0
  %266 = vmatmul.mubr.f32.gmra.mrb[0].mxu0 %v102
  %v267 = vpop.f32.mrb[0].mxu0
  %v268 = vadd.f32 0.0, %v267
  %v269 = vpop.f32.mrb[0].mxu0
  %270 = vmatprep.mubr.f32.mxu0 0.0
  %271 = vmatmul.mubr.f32.gmra.mrb[0].mxu0 %v105
  %v272 = vpop.f32.mrb[0].mxu0
  %v273 = vadd.f32 0.0, %v272
  %v274 = vpop.f32.mrb[0].mxu0
  %275 = vmatprep.mubr.f32.mxu0 0.0
  %276 = vmatmul.mubr.f32.gmra.mrb[0].mxu0 %v108
  %v277 = vpop.f32.mrb[0].mxu0
  %v278 = vadd.f32 0.0, %v277
  %v279 = vpop.f32.mrb[0].mxu0
  %280 = vmatprep.mubr.f32.mxu0 0.0
  %281 = vmatmul.mubr.f32.gmra.mrb[0].mxu0 %v111
  %v282 = vpop.f32.mrb[0].mxu0
  %v283 = vadd.f32 0.0, %v282
  %v284 = vpop.f32.mrb[0].mxu0
  %285 = vmatprep.mubr.f32.mxu0 0.0
  %286 = vmatmul.mubr.f32.gmra.mrb[0].mxu0 %v114
  %v287 = vpop.f32.mrb[0].mxu0
  %v288 = vadd.f32 0.0, %v287
  %v289 = vpop.f32.mrb[0].mxu0
  %290 = vmatprep.mubr.f32.mxu0 0.0
  %291 = vmatmul.mubr.f32.gmra.mrb[0].mxu0 %v117
  %v292 = vpop.f32.mrb[0].mxu0
  %v293 = vadd.f32 0.0, %v292
  %v294 = vpop.f32.mrb[0].mxu0
  %295 = vmatprep.mubr.f32.mxu0 0.0
  %296 = vmatmul.mubr.f32.gmra.mrb[0].mxu0 %v120
  %v297 = vpop.f32.mrb[0].mxu0
  %v298 = vadd.f32 0.0, %v297
  %v299 = vpop.f32.mrb[0].mxu0
  %300 = vmatprep.mubr.f32.mxu0 0.0
  %301 = vmatmul.mubr.f32.gmra.mrb[0].mxu0 %v123
  %v302 = vpop.f32.mrb[0].mxu0
  %v303 = vadd.f32 0.0, %v302
  %v304 = vpop.f32.mrb[0].mxu0
  %305 = vmatprep.mubr.f32.mxu0 0.0
  %306 = vmatmul.mubr.f32.gmra.mrb[0].mxu0 %v126
  %v307 = vpop.f32.mrb[0].mxu0
  %v308 = vadd.f32 0.0, %v307
  %v309 = vpop.f32.mrb[0].mxu0
  %310 = vmatprep.mubr.f32.mxu0 0.0
  %311 = vmatmul.mubr.f32.gmra.mrb[0].mxu0 %v129
  %v312 = vpop.f32.mrb[0].mxu0
  %v313 = vadd.f32 0.0, %v312
  %v314 = vpop.f32.mrb[0].mxu0
  %315 = vmatprep.mubr.f32.mxu0 0.0
  %316 = vmatmul.mubr.f32.gmra.mrb[0].mxu0 %v132
  %v317 = vpop.f32.mrb[0].mxu0
  %v318 = vadd.f32 0.0, %v317
  %v319 = vpop.f32.mrb[0].mxu0
  %320 = vmatprep.mubr.f32.mxu0 0.0
  %321 = vmatmul.mubr.f32.gmra.mrb[0].mxu0 %v135
  %v322 = vpop.f32.mrb[0].mxu0
  %v323 = vadd.f32 0.0, %v322
  %v324 = vpop.f32.mrb[0].mxu0
  %325 = vmatprep.mubr.f32.mxu0 0.0
  %326 = vmatmul.mubr.f32.gmra.mrb[0].mxu0 %v138
  %v327 = vpop.f32.mrb[0].mxu0
  %v328 = vadd.f32 0.0, %v327
  %v329 = vpop.f32.mrb[0].mxu0
  %330 = vmatprep.mubr.f32.mxu0 0.0
  %331 = vmatmul.mubr.f32.gmra.mrb[0].mxu0 %v141
  %v332 = vpop.f32.mrb[0].mxu0
  %v333 = vadd.f32 0.0, %v332
  %v334 = vpop.f32.mrb[0].mxu0
  %335 = vmatprep.mubr.f32.mxu0 0.0
  %336 = vmatmul.mubr.f32.gmra.mrb[0].mxu0 %v144
  %v337 = vpop.f32.mrb[0].mxu0
  %v338 = vadd.f32 0.0, %v337
  %v339 = vpop.f32.mrb[0].mxu0
  %340 = vmatprep.mubr.f32.mxu0 0.0
  %341 = vmatmul.mubr.f32.gmra.mrb[0].mxu0 %v147
  %v342 = vpop.f32.mrb[0].mxu0
  %v343 = vadd.f32 0.0, %v342
  %v344 = vpop.f32.mrb[0].mxu0
  %345 = vmatprep.mubr.f32.mxu0 0.0
  %346 = vmatmul.mubr.f32.gmra.mrb[0].mxu0 %v150
  %v347 = vpop.f32.mrb[0].mxu0
  %v348 = vadd.f32 0.0, %v347
  %v349 = vpop.f32.mrb[0].mxu0
  %350 = vmatprep.mubr.f32.mxu0 0.0
  %351 = vmatmul.mubr.f32.gmra.mrb[0].mxu0 %v153
  %v352 = vpop.f32.mrb[0].mxu0
  %v353 = vadd.f32 0.0, %v352
  %v354 = vpop.f32.mrb[0].mxu0
  %355 = vmatprep.mubr.f32.mxu0 0.0
  %356 = vmatmul.mubr.f32.gmra.mrb[0].mxu0 %v156
  %v357 = vpop.f32.mrb[0].mxu0
  %v358 = vadd.f32 0.0, %v357
  %v359 = vpop.f32.mrb[0].mxu0
  %360 = vmatprep.mubr.f32.mxu0 0.0
  %361 = vmatmul.mubr.f32.gmra.mrb[0].mxu0 %v159
  %v362 = vpop.f32.mrb[0].mxu0
  %v363 = vadd.f32 0.0, %v362
  %v364 = vpop.f32.mrb[0].mxu0
  %365 = vmatprep.mubr.f32.mxu0 0.0
  %366 = vmatmul.mubr.f32.gmra.mrb[0].mxu0 %v162
  %v367 = vpop.f32.mrb[0].mxu0
  %v368 = vadd.f32 0.0, %v367
  %v369 = vpop.f32.mrb[0].mxu0
  %370 = vmatprep.mubr.f32.mxu0 0.0
  %371 = vmatmul.mubr.f32.gmra.mrb[0].mxu0 %v165
  %v372 = vpop.f32.mrb[0].mxu0
  %v373 = vadd.f32 0.0, %v372
  %v374 = vpop.f32.mrb[0].mxu0
  %375 = vmatprep.mubr.f32.mxu0 0.0
  %376 = vmatmul.mubr.f32.gmra.mrb[0].mxu0 %v168
  %v377 = vpop.f32.mrb[0].mxu0
  %v378 = vadd.f32 0.0, %v377
  %v379 = vpop.f32.mrb[0].mxu0
  %380 = vmatprep.mubr.f32.mxu0 0.0
  %381 = vmatmul.mubr.f32.gmra.mrb[0].mxu0 %v171
  %v382 = vpop.f32.mrb[0].mxu0
  %v383 = vadd.f32 0.0, %v382
  %v384 = vpop.f32.mrb[0].mxu0
  %385 = vmatprep.mubr.f32.mxu0 0.0
  %386 = vmatmul.mubr.f32.gmra.mrb[0].mxu0 %v174
  %v387 = vpop.f32.mrb[0].mxu0
  %v388 = vadd.f32 0.0, %v387
  %v389 = vpop.f32.mrb[0].mxu0
  %390 = vmatprep.mubr.f32.mxu0 0.0
  %391 = vmatmul.mubr.f32.gmra.mrb[0].mxu0 %v177
  %v392 = vpop.f32.mrb[0].mxu0
  %v393 = vadd.f32 0.0, %v392
  %v394 = vpop.f32.mrb[0].mxu0
  %395 = vmatprep.mubr.f32.mxu0 0.0
  %396 = vmatmul.mubr.f32.gmra.mrb[0].mxu0 %v180
  %v397 = vpop.f32.mrb[0].mxu0
  %v398 = vadd.f32 0.0, %v397
  %v399 = vpop.f32.mrb[0].mxu0
  %400 = vmatprep.mubr.f32.mxu0 0.0
  %401 = vmatmul.mubr.f32.gmra.mrb[0].mxu0 %v183
  %v402 = vpop.f32.mrb[0].mxu0
  %v403 = vadd.f32 0.0, %v402
  %v404 = vpop.f32.mrb[0].mxu0
  %405 = vmatprep.mubr.f32.mxu0 0.0
  %406 = vmatmul.mubr.f32.gmra.mrb[0].mxu0 %v186
  %v407 = vpop.f32.mrb[0].mxu0
  %v408 = vadd.f32 0.0, %v407
  %v409 = vpop.f32.mrb[0].mxu0
  %410 = vmatprep.mubr.f32.mxu0 0.0
  %411 = vmatmul.mubr.f32.gmra.mrb[0].mxu0 %v189
  %v412 = vpop.f32.mrb[0].mxu0
  %v413 = vadd.f32 0.0, %v412
  %v414 = vpop.f32.mrb[0].mxu0
  %415 = vdwg.mxu0
  %v417 = vsel %vm94, %v26, 0
  %v420 = vsel %vm94, %v27, 0
  %v423 = vsel %vm94, %v28, 0
  %v426 = vsel %vm94, %v29, 0
  %v429 = vsel %vm94, %v30, 0
  %v432 = vsel %vm94, %v31, 0
  %v435 = vsel %vm94, %v32, 0
  %v438 = vsel %vm94, %v33, 0
  %v441 = vsel %vm94, %v34, 0
  %v444 = vsel %vm94, %v35, 0
  %v447 = vsel %vm94, %v36, 0
  %v450 = vsel %vm94, %v37, 0
  %v453 = vsel %vm94, %v38, 0
  %v456 = vsel %vm94, %v39, 0
  %v459 = vsel %vm94, %v40, 0
  %v462 = vsel %vm94, %v41, 0
  %v465 = vsel %vm94, %v42, 0
  %v468 = vsel %vm94, %v43, 0
  %v471 = vsel %vm94, %v44, 0
  %v474 = vsel %vm94, %v45, 0
  %v477 = vsel %vm94, %v46, 0
  %v480 = vsel %vm94, %v47, 0
  %v483 = vsel %vm94, %v48, 0
  %v486 = vsel %vm94, %v49, 0
  %v489 = vsel %vm94, %v50, 0
  %v492 = vsel %vm94, %v51, 0
  %v495 = vsel %vm94, %v52, 0
  %v498 = vsel %vm94, %v53, 0
  %v501 = vsel %vm94, %v54, 0
  %v504 = vsel %vm94, %v55, 0
  %v507 = vsel %vm94, %v56, 0
  %v510 = vsel %vm94, %v57, 0
  %512 = vmatprep.subr.mxu0 0.0
  %513 = vmatpush1.msra.mxu0 %v58
  %514 = vmatprep.subr.mxu0 0.0
  %515 = vmatpush1.msra.mxu0 %v59
  %516 = vmatprep.subr.mxu0 0.0
  %517 = vmatpush1.msra.mxu0 0.0
  %518 = vmatprep.subr.mxu0 0.0
  %519 = vmatpush1.msra.mxu0 0.0
  %520 = vmatprep.subr.mxu0 0.0
  %521 = vmatpush1.msra.mxu0 0.0
  %522 = vmatprep.subr.mxu0 0.0
  %523 = vmatpush1.msra.mxu0 0.0
  %524 = vmatprep.subr.mxu0 0.0
  %525 = vmatpush1.msra.mxu0 0.0
  %526 = vmatprep.subr.mxu0 0.0
  %527 = vmatpush1.msra.mxu0 0.0
  %528 = vmatprep.subr.mxu0 0.0
  %529 = vmatpush1.msra.mxu0 0.0
  %530 = vmatprep.subr.mxu0 0.0
  %531 = vmatpush1.msra.mxu0 0.0
  %532 = vmatprep.subr.mxu0 0.0
  %533 = vmatpush1.msra.mxu0 0.0
  %534 = vmatprep.subr.mxu0 0.0
  %535 = vmatpush1.msra.mxu0 0.0
  %536 = vmatprep.subr.mxu0 0.0
  %537 = vmatpush1.msra.mxu0 0.0
  %538 = vmatprep.subr.mxu0 0.0
  %539 = vmatpush1.msra.mxu0 0.0
  %540 = vmatprep.subr.mxu0 0.0
  %541 = vmatpush1.msra.mxu0 0.0
  %542 = vmatprep.subr.mxu0 0.0
  %543 = vmatpush1.msra.mxu0 0.0
  %544 = vmatprep.subr.mxu0 0.0
  %545 = vmatpush1.msra.mxu0 0.0
  %546 = vmatprep.subr.mxu0 0.0
  %547 = vmatpush1.msra.mxu0 0.0
  %548 = vmatprep.subr.mxu0 0.0
  %549 = vmatpush1.msra.mxu0 0.0
  %550 = vmatprep.subr.mxu0 0.0
  %551 = vmatpush1.msra.mxu0 0.0
  %552 = vmatprep.subr.mxu0 0.0
  %553 = vmatpush1.msra.mxu0 0.0
  %554 = vmatprep.subr.mxu0 0.0
  %555 = vmatpush1.msra.mxu0 0.0
  %556 = vmatprep.subr.mxu0 0.0
  %557 = vmatpush1.msra.mxu0 0.0
  %558 = vmatprep.subr.mxu0 0.0
  %559 = vmatpush1.msra.mxu0 0.0
  %560 = vmatprep.subr.mxu0 0.0
  %561 = vmatpush1.msra.mxu0 0.0
  %562 = vmatprep.subr.mxu0 0.0
  %563 = vmatpush1.msra.mxu0 0.0
  %564 = vmatprep.subr.mxu0 0.0
  %565 = vmatpush1.msra.mxu0 0.0
  %566 = vmatprep.subr.mxu0 0.0
  %567 = vmatpush1.msra.mxu0 0.0
  %568 = vmatprep.subr.mxu0 0.0
  %569 = vmatpush1.msra.mxu0 0.0
  %570 = vmatprep.subr.mxu0 0.0
  %571 = vmatpush1.msra.mxu0 0.0
  %572 = vmatprep.subr.mxu0 0.0
  %573 = vmatpush1.msra.mxu0 0.0
  %574 = vmatprep.subr.mxu0 0.0
  %575 = vmatpush1.msra.mxu0 0.0
  %576 = vmatprep.mubr.f32.mxu0 0.0
  %577 = vmatmul.mubr.f32.gmra.mrb[0].mxu0 %v417
  %v578 = vpop.f32.mrb[0].mxu0
  %v579 = vadd.f32 %v258, %v578
  %v580 = vpop.f32.mrb[0].mxu0
  %581 = vmatprep.mubr.f32.mxu0 0.0
  %582 = vmatmul.mubr.f32.gmra.mrb[0].mxu0 %v420
  %v583 = vpop.f32.mrb[0].mxu0
  %v584 = vadd.f32 %v263, %v583
  %v585 = vpop.f32.mrb[0].mxu0
  %586 = vmatprep.mubr.f32.mxu0 0.0
  %587 = vmatmul.mubr.f32.gmra.mrb[0].mxu0 %v423
  %v588 = vpop.f32.mrb[0].mxu0
  %v589 = vadd.f32 %v268, %v588
  %v590 = vpop.f32.mrb[0].mxu0
  %591 = vmatprep.mubr.f32.mxu0 0.0
  %592 = vmatmul.mubr.f32.gmra.mrb[0].mxu0 %v426
  %v593 = vpop.f32.mrb[0].mxu0
  %v594 = vadd.f32 %v273, %v593
  %v595 = vpop.f32.mrb[0].mxu0
  %596 = vmatprep.mubr.f32.mxu0 0.0
  %597 = vmatmul.mubr.f32.gmra.mrb[0].mxu0 %v429
  %v598 = vpop.f32.mrb[0].mxu0
  %v599 = vadd.f32 %v278, %v598
  %v600 = vpop.f32.mrb[0].mxu0
  %601 = vmatprep.mubr.f32.mxu0 0.0
  %602 = vmatmul.mubr.f32.gmra.mrb[0].mxu0 %v432
  %v603 = vpop.f32.mrb[0].mxu0
  %v604 = vadd.f32 %v283, %v603
  %v605 = vpop.f32.mrb[0].mxu0
  %606 = vmatprep.mubr.f32.mxu0 0.0
  %607 = vmatmul.mubr.f32.gmra.mrb[0].mxu0 %v435
  %v608 = vpop.f32.mrb[0].mxu0
  %v609 = vadd.f32 %v288, %v608
  %v610 = vpop.f32.mrb[0].mxu0
  %611 = vmatprep.mubr.f32.mxu0 0.0
  %612 = vmatmul.mubr.f32.gmra.mrb[0].mxu0 %v438
  %v613 = vpop.f32.mrb[0].mxu0
  %v614 = vadd.f32 %v293, %v613
  %v615 = vpop.f32.mrb[0].mxu0
  %616 = vmatprep.mubr.f32.mxu0 0.0
  %617 = vmatmul.mubr.f32.gmra.mrb[0].mxu0 %v441
  %v618 = vpop.f32.mrb[0].mxu0
  %v619 = vadd.f32 %v298, %v618
  %v620 = vpop.f32.mrb[0].mxu0
  %621 = vmatprep.mubr.f32.mxu0 0.0
  %622 = vmatmul.mubr.f32.gmra.mrb[0].mxu0 %v444
  %v623 = vpop.f32.mrb[0].mxu0
  %v624 = vadd.f32 %v303, %v623
  %v625 = vpop.f32.mrb[0].mxu0
  %626 = vmatprep.mubr.f32.mxu0 0.0
  %627 = vmatmul.mubr.f32.gmra.mrb[0].mxu0 %v447
  %v628 = vpop.f32.mrb[0].mxu0
  %v629 = vadd.f32 %v308, %v628
  %v630 = vpop.f32.mrb[0].mxu0
  %631 = vmatprep.mubr.f32.mxu0 0.0
  %632 = vmatmul.mubr.f32.gmra.mrb[0].mxu0 %v450
  %v633 = vpop.f32.mrb[0].mxu0
  %v634 = vadd.f32 %v313, %v633
  %v635 = vpop.f32.mrb[0].mxu0
  %636 = vmatprep.mubr.f32.mxu0 0.0
  %637 = vmatmul.mubr.f32.gmra.mrb[0].mxu0 %v453
  %v638 = vpop.f32.mrb[0].mxu0
  %v639 = vadd.f32 %v318, %v638
  %v640 = vpop.f32.mrb[0].mxu0
  %641 = vmatprep.mubr.f32.mxu0 0.0
  %642 = vmatmul.mubr.f32.gmra.mrb[0].mxu0 %v456
  %v643 = vpop.f32.mrb[0].mxu0
  %v644 = vadd.f32 %v323, %v643
  %v645 = vpop.f32.mrb[0].mxu0
  %646 = vmatprep.mubr.f32.mxu0 0.0
  %647 = vmatmul.mubr.f32.gmra.mrb[0].mxu0 %v459
  %v648 = vpop.f32.mrb[0].mxu0
  %v649 = vadd.f32 %v328, %v648
  %v650 = vpop.f32.mrb[0].mxu0
  %651 = vmatprep.mubr.f32.mxu0 0.0
  %652 = vmatmul.mubr.f32.gmra.mrb[0].mxu0 %v462
  %v653 = vpop.f32.mrb[0].mxu0
  %v654 = vadd.f32 %v333, %v653
  %v655 = vpop.f32.mrb[0].mxu0
  %656 = vmatprep.mubr.f32.mxu0 0.0
  %657 = vmatmul.mubr.f32.gmra.mrb[0].mxu0 %v465
  %v658 = vpop.f32.mrb[0].mxu0
  %v659 = vadd.f32 %v338, %v658
  %v660 = vpop.f32.mrb[0].mxu0
  %661 = vmatprep.mubr.f32.mxu0 0.0
  %662 = vmatmul.mubr.f32.gmra.mrb[0].mxu0 %v468
  %v663 = vpop.f32.mrb[0].mxu0
  %v664 = vadd.f32 %v343, %v663
  %v665 = vpop.f32.mrb[0].mxu0
  %666 = vmatprep.mubr.f32.mxu0 0.0
  %667 = vmatmul.mubr.f32.gmra.mrb[0].mxu0 %v471
  %v668 = vpop.f32.mrb[0].mxu0
  %v669 = vadd.f32 %v348, %v668
  %v670 = vpop.f32.mrb[0].mxu0
  %671 = vmatprep.mubr.f32.mxu0 0.0
  %672 = vmatmul.mubr.f32.gmra.mrb[0].mxu0 %v474
  %v673 = vpop.f32.mrb[0].mxu0
  %v674 = vadd.f32 %v353, %v673
  %v675 = vpop.f32.mrb[0].mxu0
  %676 = vmatprep.mubr.f32.mxu0 0.0
  %677 = vmatmul.mubr.f32.gmra.mrb[0].mxu0 %v477
  %v678 = vpop.f32.mrb[0].mxu0
  %v679 = vadd.f32 %v358, %v678
  %v680 = vpop.f32.mrb[0].mxu0
  %681 = vmatprep.mubr.f32.mxu0 0.0
  %682 = vmatmul.mubr.f32.gmra.mrb[0].mxu0 %v480
  %v683 = vpop.f32.mrb[0].mxu0
  %v684 = vadd.f32 %v363, %v683
  %v685 = vpop.f32.mrb[0].mxu0
  %686 = vmatprep.mubr.f32.mxu0 0.0
  %687 = vmatmul.mubr.f32.gmra.mrb[0].mxu0 %v483
  %v688 = vpop.f32.mrb[0].mxu0
  %v689 = vadd.f32 %v368, %v688
  %v690 = vpop.f32.mrb[0].mxu0
  %691 = vmatprep.mubr.f32.mxu0 0.0
  %692 = vmatmul.mubr.f32.gmra.mrb[0].mxu0 %v486
  %v693 = vpop.f32.mrb[0].mxu0
  %v694 = vadd.f32 %v373, %v693
  %v695 = vpop.f32.mrb[0].mxu0
  %696 = vmatprep.mubr.f32.mxu0 0.0
  %697 = vmatmul.mubr.f32.gmra.mrb[0].mxu0 %v489
  %v698 = vpop.f32.mrb[0].mxu0
  %v699 = vadd.f32 %v378, %v698
  %v700 = vpop.f32.mrb[0].mxu0
  %701 = vmatprep.mubr.f32.mxu0 0.0
  %702 = vmatmul.mubr.f32.gmra.mrb[0].mxu0 %v492
  %v703 = vpop.f32.mrb[0].mxu0
  %v704 = vadd.f32 %v383, %v703
  %v705 = vpop.f32.mrb[0].mxu0
  %706 = vmatprep.mubr.f32.mxu0 0.0
  %707 = vmatmul.mubr.f32.gmra.mrb[0].mxu0 %v495
  %v708 = vpop.f32.mrb[0].mxu0
  %v709 = vadd.f32 %v388, %v708
  %v710 = vpop.f32.mrb[0].mxu0
  %711 = vmatprep.mubr.f32.mxu0 0.0
  %712 = vmatmul.mubr.f32.gmra.mrb[0].mxu0 %v498
  %v713 = vpop.f32.mrb[0].mxu0
  %v714 = vadd.f32 %v393, %v713
  %v715 = vpop.f32.mrb[0].mxu0
  %716 = vmatprep.mubr.f32.mxu0 0.0
  %717 = vmatmul.mubr.f32.gmra.mrb[0].mxu0 %v501
  %v718 = vpop.f32.mrb[0].mxu0
  %v719 = vadd.f32 %v398, %v718
  %v720 = vpop.f32.mrb[0].mxu0
  %721 = vmatprep.mubr.f32.mxu0 0.0
  %722 = vmatmul.mubr.f32.gmra.mrb[0].mxu0 %v504
  %v723 = vpop.f32.mrb[0].mxu0
  %v724 = vadd.f32 %v403, %v723
  %v725 = vpop.f32.mrb[0].mxu0
  %726 = vmatprep.mubr.f32.mxu0 0.0
  %727 = vmatmul.mubr.f32.gmra.mrb[0].mxu0 %v507
  %v728 = vpop.f32.mrb[0].mxu0
  %v729 = vadd.f32 %v408, %v728
  %v730 = vpop.f32.mrb[0].mxu0
  %731 = vmatprep.mubr.f32.mxu0 0.0
  %732 = vmatmul.mubr.f32.gmra.mrb[0].mxu0 %v510
  %v733 = vpop.f32.mrb[0].mxu0
  %v734 = vadd.f32 %v413, %v733
  %v735 = vpop.f32.mrb[0].mxu0
  %736 = vdwg.mxu0
  %v737 = vld [vmem:[%s4] sm:$0x1]
  %v739 = vlaneseq
  %v740 = vshrl.u32 %v739, 7
  %v741 = vsub.s32 0, %v740
  %v742 = vrot.slane %v737, %v741
  %v744 = vadd.f32 %v579, %v742
  %v745 = vadd.f32 %v584, %v742
  %v746 = vadd.f32 %v589, %v742
  %v747 = vadd.f32 %v594, %v742
  %v748 = vadd.f32 %v599, %v742
  %v749 = vadd.f32 %v604, %v742
  %v750 = vadd.f32 %v609, %v742
  %v751 = vadd.f32 %v614, %v742
  %v752 = vadd.f32 %v619, %v742
  %v753 = vadd.f32 %v624, %v742
  %v754 = vadd.f32 %v629, %v742
  %v755 = vadd.f32 %v634, %v742
  %v756 = vadd.f32 %v639, %v742
  %v757 = vadd.f32 %v644, %v742
  %v758 = vadd.f32 %v649, %v742
  %v759 = vadd.f32 %v654, %v742
  %v760 = vadd.f32 %v659, %v742
  %v761 = vadd.f32 %v664, %v742
  %v762 = vadd.f32 %v669, %v742
  %v763 = vadd.f32 %v674, %v742
  %v764 = vadd.f32 %v679, %v742
  %v765 = vadd.f32 %v684, %v742
  %v766 = vadd.f32 %v689, %v742
  %v767 = vadd.f32 %v694, %v742
  %v768 = vadd.f32 %v699, %v742
  %v769 = vadd.f32 %v704, %v742
  %v770 = vadd.f32 %v709, %v742
  %v771 = vadd.f32 %v714, %v742
  %v772 = vadd.f32 %v719, %v742
  %v773 = vadd.f32 %v724, %v742
  %v774 = vadd.f32 %v729, %v742
  %v775 = vadd.f32 %v734, %v742
  %v776 = vmax.f32 %v744, 0.0
  %v777 = vmax.f32 %v745, 0.0
  %v778 = vmax.f32 %v746, 0.0
  %v779 = vmax.f32 %v747, 0.0
  %v780 = vmax.f32 %v748, 0.0
  %v781 = vmax.f32 %v749, 0.0
  %v782 = vmax.f32 %v750, 0.0
  %v783 = vmax.f32 %v751, 0.0
  %v784 = vmax.f32 %v752, 0.0
  %v785 = vmax.f32 %v753, 0.0
  %v786 = vmax.f32 %v754, 0.0
  %v787 = vmax.f32 %v755, 0.0
  %v788 = vmax.f32 %v756, 0.0
  %v789 = vmax.f32 %v757, 0.0
  %v790 = vmax.f32 %v758, 0.0
  %v791 = vmax.f32 %v759, 0.0
  %v792 = vmax.f32 %v760, 0.0
  %v793 = vmax.f32 %v761, 0.0
  %v794 = vmax.f32 %v762, 0.0
  %v795 = vmax.f32 %v763, 0.0
  %v796 = vmax.f32 %v764, 0.0
  %v797 = vmax.f32 %v765, 0.0
  %v798 = vmax.f32 %v766, 0.0
  %v799 = vmax.f32 %v767, 0.0
  %v800 = vmax.f32 %v768, 0.0
  %v801 = vmax.f32 %v769, 0.0
  %v802 = vmax.f32 %v770, 0.0
  %v803 = vmax.f32 %v771, 0.0
  %v804 = vmax.f32 %v772, 0.0
  %v805 = vmax.f32 %v773, 0.0
  %v806 = vmax.f32 %v774, 0.0
  %v807 = vmax.f32 %v775, 0.0
  %v808 = vld [vmem:[%s5] sm:$0xff]
  %v809 = vld [vmem:[%s5 + $0x8] sm:$0xff]
  %v810 = vld [vmem:[%s5 + $0x10] sm:$0xff]
  %v811 = vld [vmem:[%s5 + $0x18] sm:$0xff]
  %v812 = vld [vmem:[%s6] sm:$0x1]
  %v814 = vlaneseq
  %v815 = vshrl.u32 %v814, 7
  %v816 = vsub.s32 0, %v815
  %v817 = vrot.slane %v812, %v816
  %vm819 = vcmask 261120
  %v821 = vsel %vm819, %v776, 0
  %v824 = vsel %vm819, %v777, 0
  %v827 = vsel %vm819, %v778, 0
  %v830 = vsel %vm819, %v779, 0
  %v833 = vsel %vm819, %v780, 0
  %v836 = vsel %vm819, %v781, 0
  %v839 = vsel %vm819, %v782, 0
  %v842 = vsel %vm819, %v783, 0
  %v845 = vsel %vm819, %v784, 0
  %v848 = vsel %vm819, %v785, 0
  %v851 = vsel %vm819, %v786, 0
  %v854 = vsel %vm819, %v787, 0
  %v857 = vsel %vm819, %v788, 0
  %v860 = vsel %vm819, %v789, 0
  %v863 = vsel %vm819, %v790, 0
  %v866 = vsel %vm819, %v791, 0
  %v869 = vsel %vm819, %v792, 0
  %v872 = vsel %vm819, %v793, 0
  %v875 = vsel %vm819, %v794, 0
  %v878 = vsel %vm819, %v795, 0
  %v881 = vsel %vm819, %v796, 0
  %v884 = vsel %vm819, %v797, 0
  %v887 = vsel %vm819, %v798, 0
  %v890 = vsel %vm819, %v799, 0
  %v893 = vsel %vm819, %v800, 0
  %v896 = vsel %vm819, %v801, 0
  %v899 = vsel %vm819, %v802, 0
  %v902 = vsel %vm819, %v803, 0
  %v905 = vsel %vm819, %v804, 0
  %v908 = vsel %vm819, %v805, 0
  %v911 = vsel %vm819, %v806, 0
  %v914 = vsel %vm819, %v807, 0
  %916 = vmatprep.subr.mxu0 0.0
  %917 = vmatpush1.msra.mxu0 %v808
  %918 = vmatprep.subr.mxu0 0.0
  %919 = vmatpush1.msra.mxu0 %v809
  %920 = vmatprep.subr.mxu0 0.0
  %921 = vmatpush1.msra.mxu0 %v810
  %922 = vmatprep.subr.mxu0 0.0
  %923 = vmatpush1.msra.mxu0 %v811
  %924 = vmatprep.subr.mxu0 0.0
  %925 = vmatpush1.msra.mxu0 0.0
  %926 = vmatprep.subr.mxu0 0.0
  %927 = vmatpush1.msra.mxu0 0.0
  %928 = vmatprep.subr.mxu0 0.0
  %929 = vmatpush1.msra.mxu0 0.0
  %930 = vmatprep.subr.mxu0 0.0
  %931 = vmatpush1.msra.mxu0 0.0
  %932 = vmatprep.subr.mxu0 0.0
  %933 = vmatpush1.msra.mxu0 0.0
  %934 = vmatprep.subr.mxu0 0.0
  %935 = vmatpush1.msra.mxu0 0.0
  %936 = vmatprep.subr.mxu0 0.0
  %937 = vmatpush1.msra.mxu0 0.0
  %938 = vmatprep.subr.mxu0 0.0
  %939 = vmatpush1.msra.mxu0 0.0
  %940 = vmatprep.subr.mxu0 0.0
  %941 = vmatpush1.msra.mxu0 0.0
  %942 = vmatprep.subr.mxu0 0.0
  %943 = vmatpush1.msra.mxu0 0.0
  %944 = vmatprep.subr.mxu0 0.0
  %945 = vmatpush1.msra.mxu0 0.0
  %946 = vmatprep.subr.mxu0 0.0
  %947 = vmatpush1.msra.mxu0 0.0
  %948 = vmatprep.subr.mxu0 0.0
  %949 = vmatpush1.msra.mxu0 0.0
  %950 = vmatprep.subr.mxu0 0.0
  %951 = vmatpush1.msra.mxu0 0.0
  %952 = vmatprep.subr.mxu0 0.0
  %953 = vmatpush1.msra.mxu0 0.0
  %954 = vmatprep.subr.mxu0 0.0
  %955 = vmatpush1.msra.mxu0 0.0
  %956 = vmatprep.subr.mxu0 0.0
  %957 = vmatpush1.msra.mxu0 0.0
  %958 = vmatprep.subr.mxu0 0.0
  %959 = vmatpush1.msra.mxu0 0.0
  %960 = vmatprep.subr.mxu0 0.0
  %961 = vmatpush1.msra.mxu0 0.0
  %962 = vmatprep.subr.mxu0 0.0
  %963 = vmatpush1.msra.mxu0 0.0
  %964 = vmatprep.subr.mxu0 0.0
  %965 = vmatpush1.msra.mxu0 0.0
  %966 = vmatprep.subr.mxu0 0.0
  %967 = vmatpush1.msra.mxu0 0.0
  %968 = vmatprep.subr.mxu0 0.0
  %969 = vmatpush1.msra.mxu0 0.0
  %970 = vmatprep.subr.mxu0 0.0
  %971 = vmatpush1.msra.mxu0 0.0
  %972 = vmatprep.subr.mxu0 0.0
  %973 = vmatpush1.msra.mxu0 0.0
  %974 = vmatprep.subr.mxu0 0.0
  %975 = vmatpush1.msra.mxu0 0.0
  %976 = vmatprep.subr.mxu0 0.0
  %977 = vmatpush1.msra.mxu0 0.0
  %978 = vmatprep.subr.mxu0 0.0
  %979 = vmatpush1.msra.mxu0 0.0
  %980 = vmatprep.mubr.f32.mxu0 0.0
  %981 = vmatmul.mubr.f32.gmra.mrb[0].mxu0 %v821
  %v982 = vpop.f32.mrb[0].mxu0
  %v983 = vadd.f32 %v817, %v982
  %v984 = vpop.f32.mrb[0].mxu0
  %985 = vmatprep.mubr.f32.mxu0 0.0
  %986 = vmatmul.mubr.f32.gmra.mrb[0].mxu0 %v824
  %v987 = vpop.f32.mrb[0].mxu0
  %v988 = vadd.f32 %v817, %v987
  %v989 = vpop.f32.mrb[0].mxu0
  %990 = vmatprep.mubr.f32.mxu0 0.0
  %991 = vmatmul.mubr.f32.gmra.mrb[0].mxu0 %v827
  %v992 = vpop.f32.mrb[0].mxu0
  %v993 = vadd.f32 %v817, %v992
  %v994 = vpop.f32.mrb[0].mxu0
  %995 = vmatprep.mubr.f32.mxu0 0.0
  %996 = vmatmul.mubr.f32.gmra.mrb[0].mxu0 %v830
  %v997 = vpop.f32.mrb[0].mxu0
  %v998 = vadd.f32 %v817, %v997
  %v999 = vpop.f32.mrb[0].mxu0
  %1000 = vmatprep.mubr.f32.mxu0 0.0
  %1001 = vmatmul.mubr.f32.gmra.mrb[0].mxu0 %v833
  %v1002 = vpop.f32.mrb[0].mxu0
  %v1003 = vadd.f32 %v817, %v1002
  %v1004 = vpop.f32.mrb[0].mxu0
  %1005 = vmatprep.mubr.f32.mxu0 0.0
  %1006 = vmatmul.mubr.f32.gmra.mrb[0].mxu0 %v836
  %v1007 = vpop.f32.mrb[0].mxu0
  %v1008 = vadd.f32 %v817, %v1007
  %v1009 = vpop.f32.mrb[0].mxu0
  %1010 = vmatprep.mubr.f32.mxu0 0.0
  %1011 = vmatmul.mubr.f32.gmra.mrb[0].mxu0 %v839
  %v1012 = vpop.f32.mrb[0].mxu0
  %v1013 = vadd.f32 %v817, %v1012
  %v1014 = vpop.f32.mrb[0].mxu0
  %1015 = vmatprep.mubr.f32.mxu0 0.0
  %1016 = vmatmul.mubr.f32.gmra.mrb[0].mxu0 %v842
  %v1017 = vpop.f32.mrb[0].mxu0
  %v1018 = vadd.f32 %v817, %v1017
  %v1019 = vpop.f32.mrb[0].mxu0
  %1020 = vmatprep.mubr.f32.mxu0 0.0
  %1021 = vmatmul.mubr.f32.gmra.mrb[0].mxu0 %v845
  %v1022 = vpop.f32.mrb[0].mxu0
  %v1023 = vadd.f32 %v817, %v1022
  %v1024 = vpop.f32.mrb[0].mxu0
  %1025 = vmatprep.mubr.f32.mxu0 0.0
  %1026 = vmatmul.mubr.f32.gmra.mrb[0].mxu0 %v848
  %v1027 = vpop.f32.mrb[0].mxu0
  %v1028 = vadd.f32 %v817, %v1027
  %v1029 = vpop.f32.mrb[0].mxu0
  %1030 = vmatprep.mubr.f32.mxu0 0.0
  %1031 = vmatmul.mubr.f32.gmra.mrb[0].mxu0 %v851
  %v1032 = vpop.f32.mrb[0].mxu0
  %v1033 = vadd.f32 %v817, %v1032
  %v1034 = vpop.f32.mrb[0].mxu0
  %1035 = vmatprep.mubr.f32.mxu0 0.0
  %1036 = vmatmul.mubr.f32.gmra.mrb[0].mxu0 %v854
  %v1037 = vpop.f32.mrb[0].mxu0
  %v1038 = vadd.f32 %v817, %v1037
  %v1039 = vpop.f32.mrb[0].mxu0
  %1040 = vmatprep.mubr.f32.mxu0 0.0
  %1041 = vmatmul.mubr.f32.gmra.mrb[0].mxu0 %v857
  %v1042 = vpop.f32.mrb[0].mxu0
  %v1043 = vadd.f32 %v817, %v1042
  %v1044 = vpop.f32.mrb[0].mxu0
  %1045 = vmatprep.mubr.f32.mxu0 0.0
  %1046 = vmatmul.mubr.f32.gmra.mrb[0].mxu0 %v860
  %v1047 = vpop.f32.mrb[0].mxu0
  %v1048 = vadd.f32 %v817, %v1047
  %v1049 = vpop.f32.mrb[0].mxu0
  %1050 = vmatprep.mubr.f32.mxu0 0.0
  %1051 = vmatmul.mubr.f32.gmra.mrb[0].mxu0 %v863
  %v1052 = vpop.f32.mrb[0].mxu0
  %v1053 = vadd.f32 %v817, %v1052
  %v1054 = vpop.f32.mrb[0].mxu0
  %1055 = vmatprep.mubr.f32.mxu0 0.0
  %1056 = vmatmul.mubr.f32.gmra.mrb[0].mxu0 %v866
  %v1057 = vpop.f32.mrb[0].mxu0
  %v1058 = vadd.f32 %v817, %v1057
  %v1059 = vpop.f32.mrb[0].mxu0
  %1060 = vmatprep.mubr.f32.mxu0 0.0
  %1061 = vmatmul.mubr.f32.gmra.mrb[0].mxu0 %v869
  %v1062 = vpop.f32.mrb[0].mxu0
  %v1063 = vadd.f32 %v817, %v1062
  %v1064 = vpop.f32.mrb[0].mxu0
  %1065 = vmatprep.mubr.f32.mxu0 0.0
  %1066 = vmatmul.mubr.f32.gmra.mrb[0].mxu0 %v872
  %v1067 = vpop.f32.mrb[0].mxu0
  %v1068 = vadd.f32 %v817, %v1067
  %v1069 = vpop.f32.mrb[0].mxu0
  %1070 = vmatprep.mubr.f32.mxu0 0.0
  %1071 = vmatmul.mubr.f32.gmra.mrb[0].mxu0 %v875
  %v1072 = vpop.f32.mrb[0].mxu0
  %v1073 = vadd.f32 %v817, %v1072
  %v1074 = vpop.f32.mrb[0].mxu0
  %1075 = vmatprep.mubr.f32.mxu0 0.0
  %1076 = vmatmul.mubr.f32.gmra.mrb[0].mxu0 %v878
  %v1077 = vpop.f32.mrb[0].mxu0
  %v1078 = vadd.f32 %v817, %v1077
  %v1079 = vpop.f32.mrb[0].mxu0
  %1080 = vmatprep.mubr.f32.mxu0 0.0
  %1081 = vmatmul.mubr.f32.gmra.mrb[0].mxu0 %v881
  %v1082 = vpop.f32.mrb[0].mxu0
  %v1083 = vadd.f32 %v817, %v1082
  %v1084 = vpop.f32.mrb[0].mxu0
  %1085 = vmatprep.mubr.f32.mxu0 0.0
  %1086 = vmatmul.mubr.f32.gmra.mrb[0].mxu0 %v884
  %v1087 = vpop.f32.mrb[0].mxu0
  %v1088 = vadd.f32 %v817, %v1087
  %v1089 = vpop.f32.mrb[0].mxu0
  %1090 = vmatprep.mubr.f32.mxu0 0.0
  %1091 = vmatmul.mubr.f32.gmra.mrb[0].mxu0 %v887
  %v1092 = vpop.f32.mrb[0].mxu0
  %v1093 = vadd.f32 %v817, %v1092
  %v1094 = vpop.f32.mrb[0].mxu0
  %1095 = vmatprep.mubr.f32.mxu0 0.0
  %1096 = vmatmul.mubr.f32.gmra.mrb[0].mxu0 %v890
  %v1097 = vpop.f32.mrb[0].mxu0
  %v1098 = vadd.f32 %v817, %v1097
  %v1099 = vpop.f32.mrb[0].mxu0
  %1100 = vmatprep.mubr.f32.mxu0 0.0
  %1101 = vmatmul.mubr.f32.gmra.mrb[0].mxu0 %v893
  %v1102 = vpop.f32.mrb[0].mxu0
  %v1103 = vadd.f32 %v817, %v1102
  %v1104 = vpop.f32.mrb[0].mxu0
  %1105 = vmatprep.mubr.f32.mxu0 0.0
  %1106 = vmatmul.mubr.f32.gmra.mrb[0].mxu0 %v896
  %v1107 = vpop.f32.mrb[0].mxu0
  %v1108 = vadd.f32 %v817, %v1107
  %v1109 = vpop.f32.mrb[0].mxu0
  %1110 = vmatprep.mubr.f32.mxu0 0.0
  %1111 = vmatmul.mubr.f32.gmra.mrb[0].mxu0 %v899
  %v1112 = vpop.f32.mrb[0].mxu0
  %v1113 = vadd.f32 %v817, %v1112
  %v1114 = vpop.f32.mrb[0].mxu0
  %1115 = vmatprep.mubr.f32.mxu0 0.0
  %1116 = vmatmul.mubr.f32.gmra.mrb[0].mxu0 %v902
  %v1117 = vpop.f32.mrb[0].mxu0
  %v1118 = vadd.f32 %v817, %v1117
  %v1119 = vpop.f32.mrb[0].mxu0
  %1120 = vmatprep.mubr.f32.mxu0 0.0
  %1121 = vmatmul.mubr.f32.gmra.mrb[0].mxu0 %v905
  %v1122 = vpop.f32.mrb[0].mxu0
  %v1123 = vadd.f32 %v817, %v1122
  %v1124 = vpop.f32.mrb[0].mxu0
  %1125 = vmatprep.mubr.f32.mxu0 0.0
  %1126 = vmatmul.mubr.f32.gmra.mrb[0].mxu0 %v908
  %v1127 = vpop.f32.mrb[0].mxu0
  %v1128 = vadd.f32 %v817, %v1127
  %v1129 = vpop.f32.mrb[0].mxu0
  %1130 = vmatprep.mubr.f32.mxu0 0.0
  %1131 = vmatmul.mubr.f32.gmra.mrb[0].mxu0 %v911
  %v1132 = vpop.f32.mrb[0].mxu0
  %v1133 = vadd.f32 %v817, %v1132
  %v1134 = vpop.f32.mrb[0].mxu0
  %1135 = vmatprep.mubr.f32.mxu0 0.0
  %1136 = vmatmul.mubr.f32.gmra.mrb[0].mxu0 %v914
  %v1137 = vpop.f32.mrb[0].mxu0
  %v1138 = vadd.f32 %v817, %v1137
  %v1139 = vpop.f32.mrb[0].mxu0
  %1140 = vdwg.mxu0
  %vm1141 = vcmask 64512
  %1142 = vst.msk [vmem:[%s7] sm:$0xff] %vm1141, %v983
  %1143 = vst.msk [vmem:[%s7 + $0x8] sm:$0xff] %vm1141, %v988
  %1144 = vst.msk [vmem:[%s7 + $0x10] sm:$0xff] %vm1141, %v993
  %1145 = vst.msk [vmem:[%s7 + $0x18] sm:$0xff] %vm1141, %v998
  %1146 = vst.msk [vmem:[%s7 + $0x20] sm:$0xff] %vm1141, %v1003
  %1147 = vst.msk [vmem:[%s7 + $0x28] sm:$0xff] %vm1141, %v1008
  %1148 = vst.msk [vmem:[%s7 + $0x30] sm:$0xff] %vm1141, %v1013
  %1149 = vst.msk [vmem:[%s7 + $0x38] sm:$0xff] %vm1141, %v1018
  %1150 = vst.msk [vmem:[%s7 + $0x40] sm:$0xff] %vm1141, %v1023
  %1151 = vst.msk [vmem:[%s7 + $0x48] sm:$0xff] %vm1141, %v1028
  %1152 = vst.msk [vmem:[%s7 + $0x50] sm:$0xff] %vm1141, %v1033
  %1153 = vst.msk [vmem:[%s7 + $0x58] sm:$0xff] %vm1141, %v1038
  %1154 = vst.msk [vmem:[%s7 + $0x60] sm:$0xff] %vm1141, %v1043
  %1155 = vst.msk [vmem:[%s7 + $0x68] sm:$0xff] %vm1141, %v1048
  %1156 = vst.msk [vmem:[%s7 + $0x70] sm:$0xff] %vm1141, %v1053
  %1157 = vst.msk [vmem:[%s7 + $0x78] sm:$0xff] %vm1141, %v1058
  %1158 = vst.msk [vmem:[%s7 + $0x80] sm:$0xff] %vm1141, %v1063
  %1159 = vst.msk [vmem:[%s7 + $0x88] sm:$0xff] %vm1141, %v1068
  %1160 = vst.msk [vmem:[%s7 + $0x90] sm:$0xff] %vm1141, %v1073
  %1161 = vst.msk [vmem:[%s7 + $0x98] sm:$0xff] %vm1141, %v1078
  %1162 = vst.msk [vmem:[%s7 + $0xa0] sm:$0xff] %vm1141, %v1083
  %1163 = vst.msk [vmem:[%s7 + $0xa8] sm:$0xff] %vm1141, %v1088
  %1164 = vst.msk [vmem:[%s7 + $0xb0] sm:$0xff] %vm1141, %v1093
  %1165 = vst.msk [vmem:[%s7 + $0xb8] sm:$0xff] %vm1141, %v1098
  %1166 = vst.msk [vmem:[%s7 + $0xc0] sm:$0xff] %vm1141, %v1103
  %1167 = vst.msk [vmem:[%s7 + $0xc8] sm:$0xff] %vm1141, %v1108
  %1168 = vst.msk [vmem:[%s7 + $0xd0] sm:$0xff] %vm1141, %v1113
  %1169 = vst.msk [vmem:[%s7 + $0xd8] sm:$0xff] %vm1141, %v1118
  %1170 = vst.msk [vmem:[%s7 + $0xe0] sm:$0xff] %vm1141, %v1123
  %1171 = vst.msk [vmem:[%s7 + $0xe8] sm:$0xff] %vm1141, %v1128
  %1172 = vst.msk [vmem:[%s7 + $0xf0] sm:$0xff] %vm1141, %v1133
  %1173 = vst.msk [vmem:[%s7 + $0xf8] sm:$0xff] %vm1141, %v1138
  // Predicated region
  $region30: #{tpu_custom_call.1} parent=0 // pred_check
    _
  $region31: #{tpu_custom_call.1} parent=0 // pred_check_branch
    %1175 = sbr.rel (0) target = $region33
  $region32: #{tpu_custom_call.1} parent=0 // pred_region
    _
  $region33: #{tpu_custom_call.1} parent=0 // pred_fallthru
    _
  // Predicated region
  $region34: #{tpu_custom_call.1} parent=0 // pred_check
    _
  $region35: #{tpu_custom_call.1} parent=0 // pred_check_branch
    %1177 = sbr.rel (0) target = $region37
  $region36: #{tpu_custom_call.1} parent=0 // pred_region
    _
  $region37: #{tpu_custom_call.1} parent=0 // pred_fallthru
    _

</llo_original>
